<compile_context>
chip_gen: v5e
topology: v5e:2x2
jax: 0.10.0
libtpu: 0.0.40
codegen_flags: <defaults>
</compile_context>

<pallas_src>
import math

import jax
import jax.numpy as jnp
from jax import lax
from jax.experimental import pallas as pl
from jax.experimental.pallas import tpu as pltpu

# ---- model config (small, consistent with the module's forward) -------------
BATCH = 2
SEQ = 8
NUM_HEADS = 4
HEAD_DIM = 8
HIDDEN = NUM_HEADS * HEAD_DIM          # 32
FROZEN_HEAD_INDICES = (1, 3)           # heads that get zeroed


def _attn_head_mask_kernel(x_ref, wqkv_ref, wo_ref, bias_ref, o_ref):
    """Single gridless invocation: whole (B*S, D) problem at once.

    x_ref    : (N, D)      token-major hidden states, all batches flattened
    wqkv_ref : (D, 3*D)    [Wq * 1/sqrt(hd) | Wk | Wv] column-concatenated
    wo_ref   : (D, D)      output projection, head mask folded into its columns
    bias_ref : (H*N, N)    additive block-causal bias (0 / -1e30), head-stacked
    o_ref    : (N, D)      masked attention output
    """
    N, D = x_ref.shape
    H = NUM_HEADS
    hd = D // H
    f32 = jnp.float32

    # --- fused Q/K/V projection: one MXU contraction -------------------------
    qkv = jnp.dot(x_ref[...], wqkv_ref[...], preferred_element_type=f32)  # (N, 3D)

    # --- per-head scores (static lane slices of the fused projection) --------
    # 1/sqrt(hd) is already folded into the Wq columns.
    scores = []
    for h in range(H):
        qh = qkv[:, h * hd:(h + 1) * hd]                 # (N, hd)
        kh = qkv[:, D + h * hd: D + (h + 1) * hd]        # (N, hd)
        # q @ k^T without an explicit transpose op.
        scores.append(lax.dot_general(
            qh, kh, (((1,), (1,)), ((), ())), preferred_element_type=f32))
    s = jnp.concatenate(scores, axis=0)                  # (H*N, N)

    # --- additive block-causal bias (precomputed in the wrapper) -------------
    s = s + bias_ref[...]

    # --- softmax, all in f32, exact denominator -------------------------------
    s = s - jnp.max(s, axis=-1, keepdims=True)
    p = jnp.exp(s)
    p = p / jnp.sum(p, axis=-1, keepdims=True)           # exact (review concern)

    # --- per-head P @ V, lane-concatenated back to (N, D) ---------------------
    ctxs = []
    for h in range(H):
        ph = p[h * N:(h + 1) * N, :]                     # (N, N) sublane slice
        vh = qkv[:, 2 * D + h * hd: 2 * D + (h + 1) * hd]  # (N, hd)
        ctxs.append(jnp.dot(ph, vh, preferred_element_type=f32))  # (N, hd)
    ctx = jnp.concatenate(ctxs, axis=1)                  # (N, D)

    # --- single output projection; head mask already folded into Wo columns ---
    o_ref[...] = jnp.dot(ctx, wo_ref[...],
                         preferred_element_type=f32).astype(o_ref.dtype)


def custom_attention_head_mask(x, wq, wk, wv, wo, frozen_head_indices):
    B, S, D = x.shape
    H, hd = NUM_HEADS, HEAD_DIM
    N = B * S
    assert D == H * hd

    # Per-head bool mask from the torch module (True = keep, False = frozen).
    head_mask = jnp.ones((H,), jnp.float32).at[jnp.array(frozen_head_indices)].set(0.0)
    mask_cols = jnp.repeat(head_mask, hd)                       # (D,)

    # --- one-time weight prep (NOT per-token input pre-scaling) --------------
    wq_scaled = wq * (1.0 / math.sqrt(hd))                      # fold softmax scale
    wqkv = jnp.concatenate([wq_scaled, wk, wv], axis=1)         # (D, 3D)
    wo_m = wo * mask_cols[None, :]                              # fold head mask

    # --- additive block-causal bias for the head-stacked (H*N, N) score slab --
    tok = jnp.arange(N)
    allowed = (tok[None, :] <= tok[:, None]) & ((tok[:, None] // S) == (tok[None, :] // S))
    bias = jnp.where(allowed, 0.0, -1e30).astype(jnp.float32)   # (N, N)
    bias_hn = jnp.tile(bias, (H, 1))                            # (H*N, N)

    x2d = x.reshape(N, D)                                       # token-major slab

    vmem = pl.BlockSpec(memory_space=pltpu.MemorySpace.VMEM)
    out2d = pl.pallas_call(
        _attn_head_mask_kernel,
        out_shape=jax.ShapeDtypeStruct((N, D), jnp.float32),
        in_specs=[vmem, vmem, vmem, vmem],
        out_specs=vmem,
    )(x2d, wqkv, wo_m, bias_hn)

    return out2d.reshape(B, S, D)


if __name__ == "__main__":
    key = jax.random.PRNGKey(0)
    kx, kq, kk, kv, ko = jax.random.split(key, 5)

    x = jax.random.normal(kx, (BATCH, SEQ, HIDDEN), dtype=jnp.float32)
    scale = 1.0 / math.sqrt(HIDDEN)
    wq = jax.random.normal(kq, (HIDDEN, HIDDEN), dtype=jnp.float32) * scale
    wk = jax.random.normal(kk, (HIDDEN, HIDDEN), dtype=jnp.float32) * scale
    wv = jax.random.normal(kv, (HIDDEN, HIDDEN), dtype=jnp.float32) * scale
    wo = jax.random.normal(ko, (HIDDEN, HIDDEN), dtype=jnp.float32) * scale

    out = custom_attention_head_mask(x, wq, wk, wv, wo, FROZEN_HEAD_INDICES)
    out = jax.block_until_ready(out)

    # pure-JAX reference (same math as the torch module with the synthetic attn);
    # highest matmul precision so the comparison is against true-f32 math.
    def ref(x):
        hp = lax.Precision.HIGHEST
        q = jnp.dot(x, wq, precision=hp)
        k = jnp.dot(x, wk, precision=hp)
        v = jnp.dot(x, wv, precision=hp)
        qh = q.reshape(BATCH, SEQ, NUM_HEADS, HEAD_DIM).transpose(0, 2, 1, 3)
        kh = k.reshape(BATCH, SEQ, NUM_HEADS, HEAD_DIM).transpose(0, 2, 1, 3)
        vh = v.reshape(BATCH, SEQ, NUM_HEADS, HEAD_DIM).transpose(0, 2, 1, 3)
        s = jnp.einsum("bhqd,bhkd->bhqk", qh, kh, precision=hp) / math.sqrt(HEAD_DIM)
        causal = jnp.tril(jnp.ones((SEQ, SEQ), dtype=bool))
        s = jnp.where(causal, s, -1e30)
        p = jax.nn.softmax(s, axis=-1)
        a = jnp.einsum("bhqk,bhkd->bhqd", p, vh, precision=hp).transpose(0, 2, 1, 3)
        a = jnp.dot(a.reshape(BATCH, SEQ, HIDDEN), wo, precision=hp)
        hm = jnp.ones((NUM_HEADS,)).at[jnp.array(FROZEN_HEAD_INDICES)].set(0.0)
        a = a.reshape(BATCH, SEQ, NUM_HEADS, HEAD_DIM) * hm[None, None, :, None]
        return a.reshape(BATCH, SEQ, HIDDEN)

    assert jnp.allclose(out, ref(x), atol=1e-3, rtol=1e-3)
    print("KERNEL_OK")
</pallas_src>

<mosaic_0001>
module attributes {stable_mosaic.version = 11 : i64} {
  func.func @_attn_head_mask_kernel(%arg0: memref<16x32xf32, #tpu.memory_space<vmem>>, %arg1: memref<32x96xf32, #tpu.memory_space<vmem>>, %arg2: memref<32x32xf32, #tpu.memory_space<vmem>>, %arg3: memref<64x16xf32, #tpu.memory_space<vmem>>, %arg4: memref<16x32xf32, #tpu.memory_space<vmem>>) attributes {dimension_semantics = [], scalar_prefetch = 0 : i64, scratch_operands = 0 : i64, tpu.core_type = #tpu.core_type<tc>} {
    %c0 = arith.constant 0 : index
    %c0_0 = arith.constant 0 : index
    %0 = vector.load %arg0[%c0, %c0_0] : memref<16x32xf32, #tpu.memory_space<vmem>>, vector<16x32xf32>
    %c0_1 = arith.constant 0 : index
    %c0_2 = arith.constant 0 : index
    %1 = vector.load %arg1[%c0_1, %c0_2] : memref<32x96xf32, #tpu.memory_space<vmem>>, vector<32x96xf32>
    %cst = arith.constant dense<0.000000e+00> : vector<16x96xf32>
    %2 = tpu.matmul %0, %1, %cst {dimension_numbers = #tpu.dot_dimension_numbers<[1], [0], [0], [1], [0, 0, 1, 1], [], []>} : vector<16x32xf32>, vector<32x96xf32>, vector<16x96xf32> -> vector<16x96xf32>
    %3 = vector.extract_strided_slice %2 {offsets = [0, 0], sizes = [16, 8], strides = [1, 1]} : vector<16x96xf32> to vector<16x8xf32>
    %4 = vector.extract_strided_slice %2 {offsets = [0, 32], sizes = [16, 8], strides = [1, 1]} : vector<16x96xf32> to vector<16x8xf32>
    %cst_3 = arith.constant dense<0.000000e+00> : vector<16x16xf32>
    %5 = tpu.matmul %3, %4, %cst_3 {dimension_numbers = #tpu.dot_dimension_numbers<[1], [1], [0], [0], [0, 0, 1, 0], [], []>} : vector<16x8xf32>, vector<16x8xf32>, vector<16x16xf32> -> vector<16x16xf32>
    %6 = vector.extract_strided_slice %2 {offsets = [0, 8], sizes = [16, 8], strides = [1, 1]} : vector<16x96xf32> to vector<16x8xf32>
    %7 = vector.extract_strided_slice %2 {offsets = [0, 40], sizes = [16, 8], strides = [1, 1]} : vector<16x96xf32> to vector<16x8xf32>
    %cst_4 = arith.constant dense<0.000000e+00> : vector<16x16xf32>
    %8 = tpu.matmul %6, %7, %cst_4 {dimension_numbers = #tpu.dot_dimension_numbers<[1], [1], [0], [0], [0, 0, 1, 0], [], []>} : vector<16x8xf32>, vector<16x8xf32>, vector<16x16xf32> -> vector<16x16xf32>
    %9 = vector.extract_strided_slice %2 {offsets = [0, 16], sizes = [16, 8], strides = [1, 1]} : vector<16x96xf32> to vector<16x8xf32>
    %10 = vector.extract_strided_slice %2 {offsets = [0, 48], sizes = [16, 8], strides = [1, 1]} : vector<16x96xf32> to vector<16x8xf32>
    %cst_5 = arith.constant dense<0.000000e+00> : vector<16x16xf32>
    %11 = tpu.matmul %9, %10, %cst_5 {dimension_numbers = #tpu.dot_dimension_numbers<[1], [1], [0], [0], [0, 0, 1, 0], [], []>} : vector<16x8xf32>, vector<16x8xf32>, vector<16x16xf32> -> vector<16x16xf32>
    %12 = vector.extract_strided_slice %2 {offsets = [0, 24], sizes = [16, 8], strides = [1, 1]} : vector<16x96xf32> to vector<16x8xf32>
    %13 = vector.extract_strided_slice %2 {offsets = [0, 56], sizes = [16, 8], strides = [1, 1]} : vector<16x96xf32> to vector<16x8xf32>
    %cst_6 = arith.constant dense<0.000000e+00> : vector<16x16xf32>
    %14 = tpu.matmul %12, %13, %cst_6 {dimension_numbers = #tpu.dot_dimension_numbers<[1], [1], [0], [0], [0, 0, 1, 0], [], []>} : vector<16x8xf32>, vector<16x8xf32>, vector<16x16xf32> -> vector<16x16xf32>
    %15 = tpu.concatenate %5, %8, %11, %14 in 0 : vector<16x16xf32>, vector<16x16xf32>, vector<16x16xf32>, vector<16x16xf32> -> vector<64x16xf32>
    %c0_7 = arith.constant 0 : index
    %c0_8 = arith.constant 0 : index
    %16 = vector.load %arg3[%c0_7, %c0_8] : memref<64x16xf32, #tpu.memory_space<vmem>>, vector<64x16xf32>
    %17 = arith.addf %15, %16 : vector<64x16xf32>
    %cst_9 = arith.constant dense<0xFF800000> : vector<64xf32>
    %18 = vector.multi_reduction <maximumf>, %17, %cst_9 [1] : vector<64x16xf32> to vector<64xf32>
    %19 = vector.shape_cast %18 : vector<64xf32> to vector<64x1xf32>
    %20 = vector.broadcast %19 : vector<64x1xf32> to vector<64x16xf32>
    %21 = arith.subf %17, %20 : vector<64x16xf32>
    %22 = math.exp %21 : vector<64x16xf32>
    %cst_10 = arith.constant dense<0.000000e+00> : vector<64xf32>
    %23 = vector.multi_reduction <add>, %22, %cst_10 [1] : vector<64x16xf32> to vector<64xf32>
    %24 = vector.shape_cast %23 : vector<64xf32> to vector<64x1xf32>
    %25 = vector.broadcast %24 : vector<64x1xf32> to vector<64x16xf32>
    %26 = arith.divf %22, %25 : vector<64x16xf32>
    %27 = vector.extract_strided_slice %26 {offsets = [0, 0], sizes = [16, 16], strides = [1, 1]} : vector<64x16xf32> to vector<16x16xf32>
    %28 = vector.extract_strided_slice %2 {offsets = [0, 64], sizes = [16, 8], strides = [1, 1]} : vector<16x96xf32> to vector<16x8xf32>
    %cst_11 = arith.constant dense<0.000000e+00> : vector<16x8xf32>
    %29 = tpu.matmul %27, %28, %cst_11 {dimension_numbers = #tpu.dot_dimension_numbers<[1], [0], [0], [1], [0, 0, 1, 1], [], []>} : vector<16x16xf32>, vector<16x8xf32>, vector<16x8xf32> -> vector<16x8xf32>
    %30 = vector.extract_strided_slice %26 {offsets = [16, 0], sizes = [16, 16], strides = [1, 1]} : vector<64x16xf32> to vector<16x16xf32>
    %31 = vector.extract_strided_slice %2 {offsets = [0, 72], sizes = [16, 8], strides = [1, 1]} : vector<16x96xf32> to vector<16x8xf32>
    %cst_12 = arith.constant dense<0.000000e+00> : vector<16x8xf32>
    %32 = tpu.matmul %30, %31, %cst_12 {dimension_numbers = #tpu.dot_dimension_numbers<[1], [0], [0], [1], [0, 0, 1, 1], [], []>} : vector<16x16xf32>, vector<16x8xf32>, vector<16x8xf32> -> vector<16x8xf32>
    %33 = vector.extract_strided_slice %26 {offsets = [32, 0], sizes = [16, 16], strides = [1, 1]} : vector<64x16xf32> to vector<16x16xf32>
    %34 = vector.extract_strided_slice %2 {offsets = [0, 80], sizes = [16, 8], strides = [1, 1]} : vector<16x96xf32> to vector<16x8xf32>
    %cst_13 = arith.constant dense<0.000000e+00> : vector<16x8xf32>
    %35 = tpu.matmul %33, %34, %cst_13 {dimension_numbers = #tpu.dot_dimension_numbers<[1], [0], [0], [1], [0, 0, 1, 1], [], []>} : vector<16x16xf32>, vector<16x8xf32>, vector<16x8xf32> -> vector<16x8xf32>
    %36 = vector.extract_strided_slice %26 {offsets = [48, 0], sizes = [16, 16], strides = [1, 1]} : vector<64x16xf32> to vector<16x16xf32>
    %37 = vector.extract_strided_slice %2 {offsets = [0, 88], sizes = [16, 8], strides = [1, 1]} : vector<16x96xf32> to vector<16x8xf32>
    %cst_14 = arith.constant dense<0.000000e+00> : vector<16x8xf32>
    %38 = tpu.matmul %36, %37, %cst_14 {dimension_numbers = #tpu.dot_dimension_numbers<[1], [0], [0], [1], [0, 0, 1, 1], [], []>} : vector<16x16xf32>, vector<16x8xf32>, vector<16x8xf32> -> vector<16x8xf32>
    %39 = tpu.concatenate %29, %32, %35, %38 in 1 : vector<16x8xf32>, vector<16x8xf32>, vector<16x8xf32>, vector<16x8xf32> -> vector<16x32xf32>
    %c0_15 = arith.constant 0 : index
    %c0_16 = arith.constant 0 : index
    %40 = vector.load %arg2[%c0_15, %c0_16] : memref<32x32xf32, #tpu.memory_space<vmem>>, vector<32x32xf32>
    %cst_17 = arith.constant dense<0.000000e+00> : vector<16x32xf32>
    %41 = tpu.matmul %39, %40, %cst_17 {dimension_numbers = #tpu.dot_dimension_numbers<[1], [0], [0], [1], [0, 0, 1, 1], [], []>} : vector<16x32xf32>, vector<32x32xf32>, vector<16x32xf32> -> vector<16x32xf32>
    %c0_18 = arith.constant 0 : index
    %c0_19 = arith.constant 0 : index
    %42 = vector.load %arg4[%c0_18, %c0_19] : memref<16x32xf32, #tpu.memory_space<vmem>>, vector<16x32xf32>
    tpu.vector_store %arg4[%c0_18, %c0_19], %41 {strides = array<i32>} : memref<16x32xf32, #tpu.memory_space<vmem>>, vector<16x32xf32>,
    return
  }
}

</mosaic_0001>

<llo_original>
// kernel: tpu_custom_call.1
$region0: #{tpu_custom_call.1}
  #allocation0 [shape = 'u32[]', space=smem, size = 0x4, offset = 0x4, fixed_abs, tag = 'smem constant byte address 0x4 - core index']
  #allocation1 [shape = 'u32[72,128]{1,0:T(1,128)}', space=vmem, size = 0x9000, scoped, tag = 'internal scratch']
  %s0 = inlined_call_operand.vmem [shape: f32[16,32], index: 0, kind: input, shape index: {}]
  %s1 = inlined_call_operand.vmem [shape: f32[32,96], index: 1, kind: input, shape index: {}]
  %s2 = inlined_call_operand.vmem [shape: f32[32,32], index: 2, kind: input, shape index: {}]
  %s3 = inlined_call_operand.vmem [shape: f32[64,16], index: 3, kind: input, shape index: {}]
  %s4 = inlined_call_operand.hbm [shape: f32[16,32], index: 4, kind: output, shape index: {}]
  %s5 = sld [smem:[#allocation0]]
  $region26: #{tpu_custom_call.1} parent=0
    _
  %s7 = ssub.s32 1, %s5
  %s8 = scalar_select 0, %s7, %s5
  $region1: #{tpu_custom_call.1} parent=0
    #allocation2 [shape = 'u8[8192]{0}', space=vmem, size = 0x2000, scoped, tag = 'output window, operand 0, single buffered']
    #allocation3 [shape = 's32[1]{0}', space=sflag, size = 0x4, scoped, tag = 'scoped memory for tpu_custom_call.1']
    %9 = vsyncpa [#allocation3], 0
    // Predicated region
    $region2: #{tpu_custom_call.1} parent=1 // pred_check
      _
    $region3: #{tpu_custom_call.1} parent=1 // pred_check_branch
      %11 = sbr.rel (0) target = $region5
    $region4: #{tpu_custom_call.1} parent=1 // pred_region
      _
    $region5: #{tpu_custom_call.1} parent=1 // pred_fallthru
      _
    // Predicated region
    $region6: #{tpu_custom_call.1} parent=1 // pred_check
      _
    $region7: #{tpu_custom_call.1} parent=1 // pred_check_branch
      %13 = sbr.rel (0) target = $region9
    $region8: #{tpu_custom_call.1} parent=1 // pred_region
      _
    $region9: #{tpu_custom_call.1} parent=1 // pred_fallthru
      _
    // Predicated region
    $region10: #{tpu_custom_call.1} parent=1 // pred_check
      _
    $region11: #{tpu_custom_call.1} parent=1 // pred_check_branch
      %15 = sbr.rel (0) target = $region13
    $region12: #{tpu_custom_call.1} parent=1 // pred_region
      _
    $region13: #{tpu_custom_call.1} parent=1 // pred_fallthru
      _
    // Predicated region
    $region14: #{tpu_custom_call.1} parent=1 // pred_check
      _
    $region15: #{tpu_custom_call.1} parent=1 // pred_check_branch
      %17 = sbr.rel (0) target = $region17
    $region16: #{tpu_custom_call.1} parent=1 // pred_region
      _
    $region17: #{tpu_custom_call.1} parent=1 // pred_fallthru
      _
    %v18 = vld [vmem:[%s0] sm:$0xff]
    %v19 = vld [vmem:[%s0 + $0x8] sm:$0xff]
    %v20 = vld [vmem:[%s1] sm:$0xff]
    %v21 = vld [vmem:[%s1 + $0x8] sm:$0xff]
    %v22 = vld [vmem:[%s1 + $0x10] sm:$0xff]
    %v23 = vld [vmem:[%s1 + $0x18] sm:$0xff]
    %vm24 = vcmask 261120
    %v26 = vsel %vm24, %v18, 0
    %v29 = vsel %vm24, %v19, 0
    %31 = vmatpush.msra.mxu0 0.0
    %32 = vmatpush.msra.mxu0 0.0
    %33 = vmatpush.msra.mxu0 0.0
    %34 = vmatpush.msra.mxu0 0.0
    %35 = vmatpush.msra.mxu0 0.0
    %36 = vmatpush.msra.mxu0 0.0
    %37 = vmatpush.msra.mxu0 0.0
    %38 = vmatpush.msra.mxu0 0.0
    %39 = vmatpush.msra.mxu0 0.0
    %40 = vmatpush.msra.mxu0 0.0
    %41 = vmatpush.msra.mxu0 0.0
    %42 = vmatpush.msra.mxu0 0.0
    %43 = vmatpush.msra.mxu0 %v23
    %44 = vmatpush.msra.mxu0 %v22
    %45 = vmatpush.msra.mxu0 %v21
    %46 = vmatpush.msra.mxu0 %v20
    %47 = vmatmul.f32.gmra.mxu0 %v26
    %v48 = vpop.f32.mrf.mxu0
    %v49 = vadd.f32 0.0, %v48
    %50 = vmatmul.f32.gmra.mxu0 %v29
    %v51 = vpop.f32.mrf.mxu0
    %v52 = vadd.f32 0.0, %v51
    %53 = vdwg.mxu0
    %56 = vrot.lane.b32.xlu0 %v49, 96
    %v57 = vpop.permute.xlu0 %56
    %58 = vrot.lane.b32.xlu0 %v52, 96
    %v59 = vpop.permute.xlu0 %58
    %vm60 = vcmask 64512
    %v61 = vsel %vm60, %v49, 0
    %v63 = vsel %vm60, %v52, 0
    %v65 = vsel %vm60, %v57, 0
    %v67 = vsel %vm60, %v59, 0
    %69 = vmatpush.xpose.msra.mxu0 0.0
    %70 = vmatpush.xpose.msra.mxu0 0.0
    %71 = vmatpush.xpose.msra.mxu0 0.0
    %72 = vmatpush.xpose.msra.mxu0 0.0
    %73 = vmatpush.xpose.msra.mxu0 0.0
    %74 = vmatpush.xpose.msra.mxu0 0.0
    %75 = vmatpush.xpose.msra.mxu0 0.0
    %76 = vmatpush.xpose.msra.mxu0 0.0
    %77 = vmatpush.xpose.msra.mxu0 0.0
    %78 = vmatpush.xpose.msra.mxu0 0.0
    %79 = vmatpush.xpose.msra.mxu0 0.0
    %80 = vmatpush.xpose.msra.mxu0 0.0
    %81 = vmatpush.xpose.msra.mxu0 0.0
    %82 = vmatpush.xpose.msra.mxu0 0.0
    %83 = vmatpush.xpose.msra.mxu0 %v67
    %84 = vmatpush.xpose.msra.mxu0 %v65
    %85 = vmatmul.f32.gmra.mxu0 %v61
    %v86 = vpop.f32.mrf.mxu0
    %v87 = vadd.f32 0.0, %v86
    %88 = vmatmul.f32.gmra.mxu0 %v63
    %v89 = vpop.f32.mrf.mxu0
    %v90 = vadd.f32 0.0, %v89
    %91 = vdwg.mxu0
    %92 = vrot.lane.b32.xlu0 %v49, 120
    %v93 = vpop.permute.xlu0 %92
    %94 = vrot.lane.b32.xlu0 %v52, 120
    %v95 = vpop.permute.xlu0 %94
    %96 = vrot.lane.b32.xlu0 %v49, 88
    %v97 = vpop.permute.xlu0 %96
    %98 = vrot.lane.b32.xlu0 %v52, 88
    %v99 = vpop.permute.xlu0 %98
    %v100 = vsel %vm60, %v93, 0
    %v102 = vsel %vm60, %v95, 0
    %v104 = vsel %vm60, %v97, 0
    %v106 = vsel %vm60, %v99, 0
    %108 = vmatpush.xpose.msra.mxu0 0.0
    %109 = vmatpush.xpose.msra.mxu0 0.0
    %110 = vmatpush.xpose.msra.mxu0 0.0
    %111 = vmatpush.xpose.msra.mxu0 0.0
    %112 = vmatpush.xpose.msra.mxu0 0.0
    %113 = vmatpush.xpose.msra.mxu0 0.0
    %114 = vmatpush.xpose.msra.mxu0 0.0
    %115 = vmatpush.xpose.msra.mxu0 0.0
    %116 = vmatpush.xpose.msra.mxu0 0.0
    %117 = vmatpush.xpose.msra.mxu0 0.0
    %118 = vmatpush.xpose.msra.mxu0 0.0
    %119 = vmatpush.xpose.msra.mxu0 0.0
    %120 = vmatpush.xpose.msra.mxu0 0.0
    %121 = vmatpush.xpose.msra.mxu0 0.0
    %122 = vmatpush.xpose.msra.mxu0 %v106
    %123 = vmatpush.xpose.msra.mxu0 %v104
    %124 = vmatmul.f32.gmra.mxu0 %v100
    %v125 = vpop.f32.mrf.mxu0
    %v126 = vadd.f32 0.0, %v125
    %127 = vmatmul.f32.gmra.mxu0 %v102
    %v128 = vpop.f32.mrf.mxu0
    %v129 = vadd.f32 0.0, %v128
    %130 = vdwg.mxu0
    %131 = vrot.lane.b32.xlu0 %v49, 112
    %v132 = vpop.permute.xlu0 %131
    %133 = vrot.lane.b32.xlu0 %v52, 112
    %v134 = vpop.permute.xlu0 %133
    %135 = vrot.lane.b32.xlu0 %v49, 80
    %v136 = vpop.permute.xlu0 %135
    %137 = vrot.lane.b32.xlu0 %v52, 80
    %v138 = vpop.permute.xlu0 %137
    %v139 = vsel %vm60, %v132, 0
    %v141 = vsel %vm60, %v134, 0
    %v143 = vsel %vm60, %v136, 0
    %v145 = vsel %vm60, %v138, 0
    %147 = vmatpush.xpose.msra.mxu0 0.0
    %148 = vmatpush.xpose.msra.mxu0 0.0
    %149 = vmatpush.xpose.msra.mxu0 0.0
    %150 = vmatpush.xpose.msra.mxu0 0.0
    %151 = vmatpush.xpose.msra.mxu0 0.0
    %152 = vmatpush.xpose.msra.mxu0 0.0
    %153 = vmatpush.xpose.msra.mxu0 0.0
    %154 = vmatpush.xpose.msra.mxu0 0.0
    %155 = vmatpush.xpose.msra.mxu0 0.0
    %156 = vmatpush.xpose.msra.mxu0 0.0
    %157 = vmatpush.xpose.msra.mxu0 0.0
    %158 = vmatpush.xpose.msra.mxu0 0.0
    %159 = vmatpush.xpose.msra.mxu0 0.0
    %160 = vmatpush.xpose.msra.mxu0 0.0
    %161 = vmatpush.xpose.msra.mxu0 %v145
    %162 = vmatpush.xpose.msra.mxu0 %v143
    %163 = vmatmul.f32.gmra.mxu0 %v139
    %v164 = vpop.f32.mrf.mxu0
    %v165 = vadd.f32 0.0, %v164
    %166 = vmatmul.f32.gmra.mxu0 %v141
    %v167 = vpop.f32.mrf.mxu0
    %v168 = vadd.f32 0.0, %v167
    %169 = vdwg.mxu0
    %170 = vrot.lane.b32.xlu0 %v49, 104
    %v171 = vpop.permute.xlu0 %170
    %172 = vrot.lane.b32.xlu0 %v52, 104
    %v173 = vpop.permute.xlu0 %172
    %174 = vrot.lane.b32.xlu0 %v49, 72
    %v175 = vpop.permute.xlu0 %174
    %176 = vrot.lane.b32.xlu0 %v52, 72
    %v177 = vpop.permute.xlu0 %176
    %v178 = vsel %vm60, %v171, 0
    %v180 = vsel %vm60, %v173, 0
    %v182 = vsel %vm60, %v175, 0
    %v184 = vsel %vm60, %v177, 0
    %186 = vmatpush.xpose.msra.mxu0 0.0
    %187 = vmatpush.xpose.msra.mxu0 0.0
    %188 = vmatpush.xpose.msra.mxu0 0.0
    %189 = vmatpush.xpose.msra.mxu0 0.0
    %190 = vmatpush.xpose.msra.mxu0 0.0
    %191 = vmatpush.xpose.msra.mxu0 0.0
    %192 = vmatpush.xpose.msra.mxu0 0.0
    %193 = vmatpush.xpose.msra.mxu0 0.0
    %194 = vmatpush.xpose.msra.mxu0 0.0
    %195 = vmatpush.xpose.msra.mxu0 0.0
    %196 = vmatpush.xpose.msra.mxu0 0.0
    %197 = vmatpush.xpose.msra.mxu0 0.0
    %198 = vmatpush.xpose.msra.mxu0 0.0
    %199 = vmatpush.xpose.msra.mxu0 0.0
    %200 = vmatpush.xpose.msra.mxu0 %v184
    %201 = vmatpush.xpose.msra.mxu0 %v182
    %202 = vmatmul.f32.gmra.mxu0 %v178
    %v203 = vpop.f32.mrf.mxu0
    %v204 = vadd.f32 0.0, %v203
    %205 = vmatmul.f32.gmra.mxu0 %v180
    %v206 = vpop.f32.mrf.mxu0
    %v207 = vadd.f32 0.0, %v206
    %208 = vdwg.mxu0
    %v209 = vld [vmem:[%s3] sm:$0xff]
    %v210 = vld [vmem:[%s3 + $0x8] sm:$0xff]
    %v211 = vld [vmem:[%s3 + $0x10] sm:$0xff]
    %v212 = vld [vmem:[%s3 + $0x18] sm:$0xff]
    %v213 = vld [vmem:[%s3 + $0x20] sm:$0xff]
    %v214 = vld [vmem:[%s3 + $0x28] sm:$0xff]
    %v215 = vld [vmem:[%s3 + $0x30] sm:$0xff]
    %v216 = vld [vmem:[%s3 + $0x38] sm:$0xff]
    %v217 = vadd.f32 %v87, %v209
    %v218 = vadd.f32 %v90, %v210
    %v219 = vadd.f32 %v126, %v211
    %v220 = vadd.f32 %v129, %v212
    %v221 = vadd.f32 %v165, %v213
    %v222 = vadd.f32 %v168, %v214
    %v223 = vadd.f32 %v204, %v215
    %v224 = vadd.f32 %v207, %v216
    %vm225 = vcmask 130048
    %v226 = vsel %vm225, %v217, -inf
    %227 = vmax.xlane.f32.xlu0 %v226
    %v228 = vpop.xlane.xlu0 %227
    %v229 = vsel %vm225, %v218, -inf
    %230 = vmax.xlane.f32.xlu0 %v229
    %v231 = vpop.xlane.xlu0 %230
    %v232 = vsel %vm225, %v219, -inf
    %233 = vmax.xlane.f32.xlu0 %v232
    %v234 = vpop.xlane.xlu0 %233
    %v235 = vsel %vm225, %v220, -inf
    %236 = vmax.xlane.f32.xlu0 %v235
    %v237 = vpop.xlane.xlu0 %236
    %v238 = vsel %vm225, %v221, -inf
    %239 = vmax.xlane.f32.xlu0 %v238
    %v240 = vpop.xlane.xlu0 %239
    %v241 = vsel %vm225, %v222, -inf
    %242 = vmax.xlane.f32.xlu0 %v241
    %v243 = vpop.xlane.xlu0 %242
    %v244 = vsel %vm225, %v223, -inf
    %245 = vmax.xlane.f32.xlu0 %v244
    %v246 = vpop.xlane.xlu0 %245
    %v247 = vsel %vm225, %v224, -inf
    %248 = vmax.xlane.f32.xlu0 %v247
    %v249 = vpop.xlane.xlu0 %248
    %v250 = vsub.f32 %v217, %v228
    %v251 = vsub.f32 %v218, %v231
    %v252 = vsub.f32 %v219, %v234
    %v253 = vsub.f32 %v220, %v237
    %v254 = vsub.f32 %v221, %v240
    %v255 = vsub.f32 %v222, %v243
    %v256 = vsub.f32 %v223, %v246
    %v257 = vsub.f32 %v224, %v249
    %v258 = vmul.f32 %v250, 1.442695
    %v259 = vpow.pop %v258
    %v260 = vmul.f32 %v251, 1.442695
    %v261 = vpow.pop %v260
    %v262 = vmul.f32 %v252, 1.442695
    %v263 = vpow.pop %v262
    %v264 = vmul.f32 %v253, 1.442695
    %v265 = vpow.pop %v264
    %v266 = vmul.f32 %v254, 1.442695
    %v267 = vpow.pop %v266
    %v268 = vmul.f32 %v255, 1.442695
    %v269 = vpow.pop %v268
    %v270 = vmul.f32 %v256, 1.442695
    %v271 = vpow.pop %v270
    %v272 = vmul.f32 %v257, 1.442695
    %v273 = vpow.pop %v272
    %v274 = vsel %vm225, %v259, 0.0
    %275 = vadd.xlane.f32.xlu0 %v274
    %v276 = vpop.xlane.xlu0 %275
    %v277 = vsel %vm225, %v261, 0.0
    %278 = vadd.xlane.f32.xlu0 %v277
    %v279 = vpop.xlane.xlu0 %278
    %v280 = vsel %vm225, %v263, 0.0
    %281 = vadd.xlane.f32.xlu0 %v280
    %v282 = vpop.xlane.xlu0 %281
    %v283 = vsel %vm225, %v265, 0.0
    %284 = vadd.xlane.f32.xlu0 %v283
    %v285 = vpop.xlane.xlu0 %284
    %v286 = vsel %vm225, %v267, 0.0
    %287 = vadd.xlane.f32.xlu0 %v286
    %v288 = vpop.xlane.xlu0 %287
    %v289 = vsel %vm225, %v269, 0.0
    %290 = vadd.xlane.f32.xlu0 %v289
    %v291 = vpop.xlane.xlu0 %290
    %v292 = vsel %vm225, %v271, 0.0
    %293 = vadd.xlane.f32.xlu0 %v292
    %v294 = vpop.xlane.xlu0 %293
    %v295 = vsel %vm225, %v273, 0.0
    %296 = vadd.xlane.f32.xlu0 %v295
    %v297 = vpop.xlane.xlu0 %296
    %v298 = vrcp.pop %v276
    %v299 = vmul.f32 %v276, %v298
    %v300 = vsub.f32 1.0, %v299
    %v301 = vmul.f32 %v298, %v300
    %v302 = vadd.f32 %v298, %v301
    %vm303 = vweird.f32 %v276
    %vm304 = vweird.f32 %v298
    %vm305 = vmor %vm303, %vm304
    %v306 = vsel %vm305, %v298, %v302
    %v307 = vand.u32 2147483647, %v276
    %vm308 = vcmp.eq.f32.partialorder %v307, 8.507059e+37
    %v309 = vand.u32 %v276, 2147483648
    %v310 = vor.u32 1.1754944e-38, %v309
    %v311 = vsel %vm308, %v310, %v306
    %v312 = vmul.f32 %v259, %v311
    %v313 = vrcp.pop %v279
    %v314 = vmul.f32 %v279, %v313
    %v315 = vsub.f32 1.0, %v314
    %v316 = vmul.f32 %v313, %v315
    %v317 = vadd.f32 %v313, %v316
    %vm318 = vweird.f32 %v279
    %vm319 = vweird.f32 %v313
    %vm320 = vmor %vm318, %vm319
    %v321 = vsel %vm320, %v313, %v317
    %v322 = vand.u32 2147483647, %v279
    %vm323 = vcmp.eq.f32.partialorder %v322, 8.507059e+37
    %v324 = vand.u32 %v279, 2147483648
    %v325 = vor.u32 1.1754944e-38, %v324
    %v326 = vsel %vm323, %v325, %v321
    %v327 = vmul.f32 %v261, %v326
    %v328 = vrcp.pop %v282
    %v329 = vmul.f32 %v282, %v328
    %v330 = vsub.f32 1.0, %v329
    %v331 = vmul.f32 %v328, %v330
    %v332 = vadd.f32 %v328, %v331
    %vm333 = vweird.f32 %v282
    %vm334 = vweird.f32 %v328
    %vm335 = vmor %vm333, %vm334
    %v336 = vsel %vm335, %v328, %v332
    %v337 = vand.u32 2147483647, %v282
    %vm338 = vcmp.eq.f32.partialorder %v337, 8.507059e+37
    %v339 = vand.u32 %v282, 2147483648
    %v340 = vor.u32 1.1754944e-38, %v339
    %v341 = vsel %vm338, %v340, %v336
    %v342 = vmul.f32 %v263, %v341
    %v343 = vrcp.pop %v285
    %v344 = vmul.f32 %v285, %v343
    %v345 = vsub.f32 1.0, %v344
    %v346 = vmul.f32 %v343, %v345
    %v347 = vadd.f32 %v343, %v346
    %vm348 = vweird.f32 %v285
    %vm349 = vweird.f32 %v343
    %vm350 = vmor %vm348, %vm349
    %v351 = vsel %vm350, %v343, %v347
    %v352 = vand.u32 2147483647, %v285
    %vm353 = vcmp.eq.f32.partialorder %v352, 8.507059e+37
    %v354 = vand.u32 %v285, 2147483648
    %v355 = vor.u32 1.1754944e-38, %v354
    %v356 = vsel %vm353, %v355, %v351
    %v357 = vmul.f32 %v265, %v356
    %v358 = vrcp.pop %v288
    %v359 = vmul.f32 %v288, %v358
    %v360 = vsub.f32 1.0, %v359
    %v361 = vmul.f32 %v358, %v360
    %v362 = vadd.f32 %v358, %v361
    %vm363 = vweird.f32 %v288
    %vm364 = vweird.f32 %v358
    %vm365 = vmor %vm363, %vm364
    %v366 = vsel %vm365, %v358, %v362
    %v367 = vand.u32 2147483647, %v288
    %vm368 = vcmp.eq.f32.partialorder %v367, 8.507059e+37
    %v369 = vand.u32 %v288, 2147483648
    %v370 = vor.u32 1.1754944e-38, %v369
    %v371 = vsel %vm368, %v370, %v366
    %v372 = vmul.f32 %v267, %v371
    %v373 = vrcp.pop %v291
    %v374 = vmul.f32 %v291, %v373
    %v375 = vsub.f32 1.0, %v374
    %v376 = vmul.f32 %v373, %v375
    %v377 = vadd.f32 %v373, %v376
    %vm378 = vweird.f32 %v291
    %vm379 = vweird.f32 %v373
    %vm380 = vmor %vm378, %vm379
    %v381 = vsel %vm380, %v373, %v377
    %v382 = vand.u32 2147483647, %v291
    %vm383 = vcmp.eq.f32.partialorder %v382, 8.507059e+37
    %v384 = vand.u32 %v291, 2147483648
    %v385 = vor.u32 1.1754944e-38, %v384
    %v386 = vsel %vm383, %v385, %v381
    %v387 = vmul.f32 %v269, %v386
    %v388 = vrcp.pop %v294
    %v389 = vmul.f32 %v294, %v388
    %v390 = vsub.f32 1.0, %v389
    %v391 = vmul.f32 %v388, %v390
    %v392 = vadd.f32 %v388, %v391
    %vm393 = vweird.f32 %v294
    %vm394 = vweird.f32 %v388
    %vm395 = vmor %vm393, %vm394
    %v396 = vsel %vm395, %v388, %v392
    %v397 = vand.u32 2147483647, %v294
    %vm398 = vcmp.eq.f32.partialorder %v397, 8.507059e+37
    %v399 = vand.u32 %v294, 2147483648
    %v400 = vor.u32 1.1754944e-38, %v399
    %v401 = vsel %vm398, %v400, %v396
    %v402 = vmul.f32 %v271, %v401
    %v403 = vrcp.pop %v297
    %v404 = vmul.f32 %v297, %v403
    %v405 = vsub.f32 1.0, %v404
    %v406 = vmul.f32 %v403, %v405
    %v407 = vadd.f32 %v403, %v406
    %vm408 = vweird.f32 %v297
    %vm409 = vweird.f32 %v403
    %vm410 = vmor %vm408, %vm409
    %v411 = vsel %vm410, %v403, %v407
    %v412 = vand.u32 2147483647, %v297
    %vm413 = vcmp.eq.f32.partialorder %v412, 8.507059e+37
    %v414 = vand.u32 %v297, 2147483648
    %v415 = vor.u32 1.1754944e-38, %v414
    %v416 = vsel %vm413, %v415, %v411
    %v417 = vmul.f32 %v273, %v416
    %418 = vrot.lane.b32.xlu0 %v49, 64
    %v419 = vpop.permute.xlu0 %418
    %420 = vrot.lane.b32.xlu0 %v52, 64
    %v421 = vpop.permute.xlu0 %420
    %v425 = vsel %vm225, %v312, 0
    %v428 = vsel %vm225, %v327, 0
    %430 = vmatpush.msra.mxu0 0.0
    %431 = vmatpush.msra.mxu0 0.0
    %432 = vmatpush.msra.mxu0 0.0
    %433 = vmatpush.msra.mxu0 0.0
    %434 = vmatpush.msra.mxu0 0.0
    %435 = vmatpush.msra.mxu0 0.0
    %436 = vmatpush.msra.mxu0 0.0
    %437 = vmatpush.msra.mxu0 0.0
    %438 = vmatpush.msra.mxu0 0.0
    %439 = vmatpush.msra.mxu0 0.0
    %440 = vmatpush.msra.mxu0 0.0
    %441 = vmatpush.msra.mxu0 0.0
    %442 = vmatpush.msra.mxu0 0.0
    %443 = vmatpush.msra.mxu0 0.0
    %444 = vmatpush.msra.mxu0 %v421
    %445 = vmatpush.msra.mxu0 %v419
    %446 = vmatmul.f32.gmra.mxu0 %v425
    %v447 = vpop.f32.mrf.mxu0
    %v448 = vadd.f32 0.0, %v447
    %449 = vmatmul.f32.gmra.mxu0 %v428
    %v450 = vpop.f32.mrf.mxu0
    %v451 = vadd.f32 0.0, %v450
    %452 = vdwg.mxu0
    %453 = vrot.lane.b32.xlu0 %v49, 56
    %v454 = vpop.permute.xlu0 %453
    %455 = vrot.lane.b32.xlu0 %v52, 56
    %v456 = vpop.permute.xlu0 %455
    %v460 = vsel %vm225, %v342, 0
    %v463 = vsel %vm225, %v357, 0
    %465 = vmatpush.msra.mxu0 0.0
    %466 = vmatpush.msra.mxu0 0.0
    %467 = vmatpush.msra.mxu0 0.0
    %468 = vmatpush.msra.mxu0 0.0
    %469 = vmatpush.msra.mxu0 0.0
    %470 = vmatpush.msra.mxu0 0.0
    %471 = vmatpush.msra.mxu0 0.0
    %472 = vmatpush.msra.mxu0 0.0
    %473 = vmatpush.msra.mxu0 0.0
    %474 = vmatpush.msra.mxu0 0.0
    %475 = vmatpush.msra.mxu0 0.0
    %476 = vmatpush.msra.mxu0 0.0
    %477 = vmatpush.msra.mxu0 0.0
    %478 = vmatpush.msra.mxu0 0.0
    %479 = vmatpush.msra.mxu0 %v456
    %480 = vmatpush.msra.mxu0 %v454
    %481 = vmatmul.f32.gmra.mxu0 %v460
    %v482 = vpop.f32.mrf.mxu0
    %v483 = vadd.f32 0.0, %v482
    %484 = vmatmul.f32.gmra.mxu0 %v463
    %v485 = vpop.f32.mrf.mxu0
    %v486 = vadd.f32 0.0, %v485
    %487 = vdwg.mxu0
    %488 = vrot.lane.b32.xlu0 %v49, 48
    %v489 = vpop.permute.xlu0 %488
    %490 = vrot.lane.b32.xlu0 %v52, 48
    %v491 = vpop.permute.xlu0 %490
    %v495 = vsel %vm225, %v372, 0
    %v498 = vsel %vm225, %v387, 0
    %500 = vmatpush.msra.mxu0 0.0
    %501 = vmatpush.msra.mxu0 0.0
    %502 = vmatpush.msra.mxu0 0.0
    %503 = vmatpush.msra.mxu0 0.0
    %504 = vmatpush.msra.mxu0 0.0
    %505 = vmatpush.msra.mxu0 0.0
    %506 = vmatpush.msra.mxu0 0.0
    %507 = vmatpush.msra.mxu0 0.0
    %508 = vmatpush.msra.mxu0 0.0
    %509 = vmatpush.msra.mxu0 0.0
    %510 = vmatpush.msra.mxu0 0.0
    %511 = vmatpush.msra.mxu0 0.0
    %512 = vmatpush.msra.mxu0 0.0
    %513 = vmatpush.msra.mxu0 0.0
    %514 = vmatpush.msra.mxu0 %v491
    %515 = vmatpush.msra.mxu0 %v489
    %516 = vmatmul.f32.gmra.mxu0 %v495
    %v517 = vpop.f32.mrf.mxu0
    %v518 = vadd.f32 0.0, %v517
    %519 = vmatmul.f32.gmra.mxu0 %v498
    %v520 = vpop.f32.mrf.mxu0
    %v521 = vadd.f32 0.0, %v520
    %522 = vdwg.mxu0
    %523 = vrot.lane.b32.xlu0 %v49, 40
    %v524 = vpop.permute.xlu0 %523
    %525 = vrot.lane.b32.xlu0 %v52, 40
    %v526 = vpop.permute.xlu0 %525
    %v530 = vsel %vm225, %v402, 0
    %v533 = vsel %vm225, %v417, 0
    %535 = vmatpush.msra.mxu0 0.0
    %536 = vmatpush.msra.mxu0 0.0
    %537 = vmatpush.msra.mxu0 0.0
    %538 = vmatpush.msra.mxu0 0.0
    %539 = vmatpush.msra.mxu0 0.0
    %540 = vmatpush.msra.mxu0 0.0
    %541 = vmatpush.msra.mxu0 0.0
    %542 = vmatpush.msra.mxu0 0.0
    %543 = vmatpush.msra.mxu0 0.0
    %544 = vmatpush.msra.mxu0 0.0
    %545 = vmatpush.msra.mxu0 0.0
    %546 = vmatpush.msra.mxu0 0.0
    %547 = vmatpush.msra.mxu0 0.0
    %548 = vmatpush.msra.mxu0 0.0
    %549 = vmatpush.msra.mxu0 %v526
    %550 = vmatpush.msra.mxu0 %v524
    %551 = vmatmul.f32.gmra.mxu0 %v530
    %v552 = vpop.f32.mrf.mxu0
    %v553 = vadd.f32 0.0, %v552
    %554 = vmatmul.f32.gmra.mxu0 %v533
    %v555 = vpop.f32.mrf.mxu0
    %v556 = vadd.f32 0.0, %v555
    %557 = vdwg.mxu0
    %560 = vrot.lane.b32.xlu0 %v483, 8
    %v561 = vpop.permute.xlu0 %560
    %562 = vrot.lane.b32.xlu0 %v486, 8
    %v563 = vpop.permute.xlu0 %562
    %568 = vrot.lane.b32.xlu0 %v518, 16
    %v569 = vpop.permute.xlu0 %568
    %570 = vrot.lane.b32.xlu0 %v521, 16
    %v571 = vpop.permute.xlu0 %570
    %576 = vrot.lane.b32.xlu0 %v553, 24
    %v577 = vpop.permute.xlu0 %576
    %578 = vrot.lane.b32.xlu0 %v556, 24
    %v579 = vpop.permute.xlu0 %578
    %v582 = vsel %vm60, %v448, %v561
    %v583 = vsel %vm60, %v451, %v563
    %v584 = vsel %vm225, %v582, %v569
    %v585 = vsel %vm225, %v583, %v571
    %vm586 = vcmask 195584
    %v587 = vsel %vm586, %v584, %v577
    %v588 = vsel %vm586, %v585, %v579
    %v589 = vld [vmem:[%s2] sm:$0xff]
    %v590 = vld [vmem:[%s2 + $0x8] sm:$0xff]
    %v591 = vld [vmem:[%s2 + $0x10] sm:$0xff]
    %v592 = vld [vmem:[%s2 + $0x18] sm:$0xff]
    %v594 = vsel %vm24, %v587, 0
    %v597 = vsel %vm24, %v588, 0
    %599 = vmatpush.msra.mxu0 0.0
    %600 = vmatpush.msra.mxu0 0.0
    %601 = vmatpush.msra.mxu0 0.0
    %602 = vmatpush.msra.mxu0 0.0
    %603 = vmatpush.msra.mxu0 0.0
    %604 = vmatpush.msra.mxu0 0.0
    %605 = vmatpush.msra.mxu0 0.0
    %606 = vmatpush.msra.mxu0 0.0
    %607 = vmatpush.msra.mxu0 0.0
    %608 = vmatpush.msra.mxu0 0.0
    %609 = vmatpush.msra.mxu0 0.0
    %610 = vmatpush.msra.mxu0 0.0
    %611 = vmatpush.msra.mxu0 %v592
    %612 = vmatpush.msra.mxu0 %v591
    %613 = vmatpush.msra.mxu0 %v590
    %614 = vmatpush.msra.mxu0 %v589
    %615 = vmatmul.f32.gmra.mxu0 %v594
    %v616 = vpop.f32.mrf.mxu0
    %v617 = vadd.f32 0.0, %v616
    %618 = vmatmul.f32.gmra.mxu0 %v597
    %v619 = vpop.f32.mrf.mxu0
    %v620 = vadd.f32 0.0, %v619
    %621 = vdwg.mxu0
    %622 = vst.msk [vmem:[#allocation2] sm:$0xff] %vm24, %v617
    %623 = vst.msk [vmem:[#allocation2 + $0x8] sm:$0xff] %vm24, %v620
    // Predicated region
    $region18: #{tpu_custom_call.1} parent=1 // pred_check
      _
    $region19: #{tpu_custom_call.1} parent=1 // pred_check_branch
      %625 = sbr.rel (0) target = $region21
    $region20: #{tpu_custom_call.1} parent=1 // pred_region
      %627 = vsyncadd [#allocation3], 0
      %s628 = sshll.u32 [#allocation2], 4
      %s629 = int_to_ptr.vmem [resolvable:$true] %s628
      %s630 = sshll.u32 %s4, 4
      %s631 = int_to_ptr.hbm [resolvable:$true] %s630
      %636 = dma.vmem_to_hbm [thread:$0]  %s629, 256, %s631, [#allocation3], 128, 128, 8
    $region21: #{tpu_custom_call.1} parent=1 // pred_fallthru
      _
    // Predicated region
    $region22: #{tpu_custom_call.1} parent=1 // pred_check
      _
    $region23: #{tpu_custom_call.1} parent=1 // pred_check_branch
      %638 = sbr.rel (0) target = $region25
    $region24: #{tpu_custom_call.1} parent=1 // pred_region
      %640 = dma.done [#allocation3], 256
    $region25: #{tpu_custom_call.1} parent=1 // pred_fallthru
      _
    %641 = vsyncpa [#allocation3], 1

</llo_original>
